<compile_context>
chip_gen: v6e
topology: v6e:2x2x1
jax: 0.10.0
libtpu: 0.0.40
codegen_flags: <defaults>
</compile_context>

<pallas_src>
import functools

import jax
import jax.numpy as jnp
from jax.experimental import pallas as pl
from jax.experimental.pallas import tpu as pltpu


LN_EPS = 1e-5
RBF_DIM = 16


def _round_up(x, m):
    return ((x + m - 1) // m) * m


def _lane_bytes(cols, dtype):
    return _round_up(max(int(cols), 1), 128) * jnp.dtype(dtype).itemsize


def _block_bytes(rows, cols, dtype):
    return _round_up(max(int(rows), 1), 8) * _lane_bytes(cols, dtype)


def _pair_embedder_kernel(
    x_ref,       # [tm, 17]      rbf(16) ++ pair_mask(1), streamed dtype
    rel_ref,     # [tm, c_z]
    nf_ref,      # [tm, c_z]
    w1_rel_ref,  # [c_z, c_pad]
    w1_nf_ref,   # [c_z, c_pad]
    wdm_ref,     # [17,  c_pad]  (wd @ W1_d, plus a zero row for the mask chan)
    w2_ref,      # [c_pad, c_pad]
    bias_ref,    # [4,   c_pad]  f32 rows: b1_fused | b2 | gamma | beta
    out_ref,     # [tm,  c_z]
    *,
    c_z: int,
    inv_cz: float,
):
    f32 = jnp.float32

    # linear_1 over cat([rel, nf, linear_d(rbf)]) with linear_d folded in.
    h = (
        jnp.dot(rel_ref[...], w1_rel_ref[...], preferred_element_type=f32)
        + jnp.dot(nf_ref[...], w1_nf_ref[...], preferred_element_type=f32)
        + jnp.dot(x_ref[...], wdm_ref[...], preferred_element_type=f32)
        + bias_ref[0:1, :]
    )

    # ReLU
    h = jnp.maximum(h, 0.0)

    # linear_2
    h = (
        jnp.dot(h.astype(w2_ref.dtype), w2_ref[...], preferred_element_type=f32)
        + bias_ref[1:2, :]
    )

    # LayerNorm over the true c_z channels.  Padded channels are exactly zero
    # (zero weight rows/cols, zero bias pad), so plain lane-sums are correct
    # as long as we divide by the real channel count.
    s = jnp.sum(h, axis=-1, keepdims=True)
    s2 = jnp.sum(h * h, axis=-1, keepdims=True)
    mean = s * inv_cz
    var = s2 * inv_cz - mean * mean
    h = (h - mean) * jax.lax.rsqrt(var + LN_EPS) * bias_ref[2:3, :] + bias_ref[3:4, :]

    # mask (packed as channel 16 of the x slab), read at point of use.
    mask = x_ref[:, RBF_DIM:RBF_DIM + 1].astype(f32)
    out_ref[...] = (h[:, :c_z] * mask).astype(out_ref.dtype)


def pair_embedder_forward(distance_rbf, nf_pair_emb, relative_pos, pair_mask,
                          params, *, tm=8192, out_dtype=None,
                          vmem_budget_bytes=48 * 1024 * 1024):
    """
    distance_rbf : [B, N, N, 16]
    nf_pair_emb  : [B, N, N, c_z]
    relative_pos : [B, N, N, c_z]
    pair_mask    : [B, N, N]
    returns      : [B, N, N, c_z]
    """
    B, N1, N2, rbf_dim = distance_rbf.shape
    assert rbf_dim == RBF_DIM
    c_z = nf_pair_emb.shape[-1]
    M = B * N1 * N2

    x_dtype = distance_rbf.dtype
    rel_dtype = relative_pos.dtype
    nf_dtype = nf_pair_emb.dtype
    weight_dtype = jnp.result_type(x_dtype, rel_dtype, nf_dtype)
    if out_dtype is None:
        out_dtype = weight_dtype

    # Channel padding for weights / intermediates only (MXU-friendly, zero pad
    # keeps LayerNorm lane-sums exact).  The OUTPUT is written at true c_z.
    c_pad = max(_round_up(c_z, 128), 128)
    f32 = jnp.float32

    # ---- streamed row slabs: native dtypes, no row padding, no extra passes ----
    x = jnp.concatenate(
        [distance_rbf.reshape(M, RBF_DIM),
         pair_mask.reshape(M, 1).astype(x_dtype)], axis=-1)      # [M, 17]
    rel = relative_pos.reshape(M, c_z)
    nf = nf_pair_emb.reshape(M, c_z)

    # ---- parameter prep: fold linear_d into linear_1, pad channels ----
    wd = params["wd"].astype(f32)            # [16, c_z]
    bd = params["bd"].astype(f32)            # [c_z]
    w1 = params["w1"].astype(f32)            # [3*c_z, c_z]  rows: rel | nf | d
    b1 = params["b1"].astype(f32)            # [c_z]
    w2 = params["w2"].astype(f32)            # [c_z, c_z]
    b2 = params["b2"].astype(f32)            # [c_z]
    gamma = params["gamma"].astype(f32)      # [c_z]
    beta = params["beta"].astype(f32)        # [c_z]

    w1_rel = w1[0 * c_z:1 * c_z]
    w1_nf = w1[1 * c_z:2 * c_z]
    w1_d = w1[2 * c_z:3 * c_z]

    hp = jax.lax.Precision.HIGHEST
    wd_fused = jnp.dot(wd, w1_d, precision=hp)            # [16, c_z]
    b1_fused = b1 + jnp.dot(bd, w1_d, precision=hp)       # [c_z]
    wdm = jnp.concatenate([wd_fused, jnp.zeros((1, c_z), f32)], axis=0)  # mask row

    dc = c_pad - c_z

    def pad_cols(a):
        return a if dc == 0 else jnp.pad(a, [(0, 0)] * (a.ndim - 1) + [(0, dc)])

    w1_rel_p = pad_cols(w1_rel).astype(weight_dtype)             # [c_z,  c_pad]
    w1_nf_p = pad_cols(w1_nf).astype(weight_dtype)               # [c_z,  c_pad]
    wdm_p = pad_cols(wdm).astype(weight_dtype)                   # [17,   c_pad]
    w2_p = jnp.pad(w2, ((0, dc), (0, dc))).astype(weight_dtype)  # [c_pad, c_pad]
    bias_slab = pad_cols(jnp.stack([b1_fused, b2, gamma, beta], axis=0))  # [4, c_pad] f32

    # ---- row-tile selection: amortize per-step overhead, keep >=2 grid steps
    #      for megacore, and fit the explicit VMEM budget ----
    per_row_vmem = 2 * (_lane_bytes(RBF_DIM + 1, x_dtype)
                        + _lane_bytes(c_z, rel_dtype)
                        + _lane_bytes(c_z, nf_dtype)
                        + _lane_bytes(c_z, out_dtype))           # double-buffered streams
    weight_vmem = 2 * (2 * _block_bytes(c_z, c_pad, weight_dtype)
                       + _block_bytes(RBF_DIM + 1, c_pad, weight_dtype)
                       + _block_bytes(c_pad, c_pad, weight_dtype)
                       + _block_bytes(4, c_pad, f32))
    slack = 2 << 20
    if M < 8:
        tm = M                                           # block dim == full dim
    else:
        tm = max(8, (min(int(tm), M) // 8) * 8)
        if M > 8:
            # keep at least 2 grid steps so "parallel" can shard across 2 TCs (v7x)
            tm = min(tm, _round_up(pl.cdiv(M, 2), 8))
        tm_vmem = max(8, ((vmem_budget_bytes - weight_vmem - slack)
                          // max(per_row_vmem, 1) // 8) * 8)
        tm = min(tm, tm_vmem)
    grid = (pl.cdiv(M, tm),)   # partial tail tile is masked by Pallas

    def row_spec(cols):
        return pl.BlockSpec((tm, cols), lambda i: (i, 0))

    def const_spec(rows, cols):
        return pl.BlockSpec((rows, cols), lambda i: (0, 0))

    ab = lambda d: jnp.dtype(d).itemsize
    flops = 2 * M * ((2 * c_z + RBF_DIM + 1) * c_pad + c_pad * c_pad)
    bytes_accessed = (
        M * (RBF_DIM + 1) * ab(x_dtype)
        + M * c_z * (ab(rel_dtype) + ab(nf_dtype))
        + M * c_z * ab(out_dtype)
        + (2 * c_z + RBF_DIM + 1 + c_pad) * c_pad * ab(weight_dtype)
        + 4 * c_pad * 4)
    cost = pl.CostEstimate(flops=int(flops), transcendentals=int(M),
                           bytes_accessed=int(bytes_accessed))

    kernel = functools.partial(_pair_embedder_kernel, c_z=c_z, inv_cz=1.0 / c_z)

    out = pl.pallas_call(
        kernel,
        out_shape=jax.ShapeDtypeStruct((M, c_z), out_dtype),
        grid_spec=pltpu.PrefetchScalarGridSpec(
            num_scalar_prefetch=0,
            grid=grid,
            in_specs=[
                row_spec(RBF_DIM + 1),            # rbf ++ mask
                row_spec(c_z),                    # relative_pos
                row_spec(c_z),                    # nf_pair_emb
                const_spec(c_z, c_pad),           # w1_rel
                const_spec(c_z, c_pad),           # w1_nf
                const_spec(RBF_DIM + 1, c_pad),   # fused wd (+ zero mask row)
                const_spec(c_pad, c_pad),         # w2
                const_spec(4, c_pad),             # b1_fused | b2 | gamma | beta
            ],
            out_specs=row_spec(c_z),
        ),
        compiler_params=pltpu.CompilerParams(
            dimension_semantics=("parallel",),
            vmem_limit_bytes=int(vmem_budget_bytes)),
        cost_estimate=cost,
    )(x, rel, nf, w1_rel_p, w1_nf_p, wdm_p, w2_p, bias_slab)

    return out.reshape(B, N1, N2, c_z)


def init_params(key, c_z):
    """Deterministic parameter init (uniform, like PyTorch Linear default)."""
    ks = jax.random.split(key, 6)

    def linear(k, fan_in, fan_out):
        bound = 1.0 / (fan_in ** 0.5)
        kw, kb = jax.random.split(k)
        w = jax.random.uniform(kw, (fan_in, fan_out), jnp.float32, -bound, bound)
        b = jax.random.uniform(kb, (fan_out,), jnp.float32, -bound, bound)
        return w, b

    wd, bd = linear(ks[0], RBF_DIM, c_z)
    w1, b1 = linear(ks[1], 3 * c_z, c_z)
    w2, b2 = linear(ks[2], c_z, c_z)
    gamma = jnp.ones((c_z,), jnp.float32)
    beta = jnp.zeros((c_z,), jnp.float32)
    return dict(wd=wd, bd=bd, w1=w1, b1=b1, w2=w2, b2=b2, gamma=gamma, beta=beta)


def reference_forward(distance_rbf, nf_pair_emb, relative_pos, pair_mask, p):
    """Pure-JAX reference mirroring the PyTorch forward."""
    d = distance_rbf @ p["wd"] + p["bd"]
    x = jnp.concatenate([relative_pos, nf_pair_emb, d], axis=-1)
    x = x @ p["w1"] + p["b1"]
    x = jnp.maximum(x, 0.0)
    x = x @ p["w2"] + p["b2"]
    mean = jnp.mean(x, axis=-1, keepdims=True)
    var = jnp.mean((x - mean) ** 2, axis=-1, keepdims=True)
    x = (x - mean) / jnp.sqrt(var + LN_EPS) * p["gamma"] + p["beta"]
    return x * pair_mask[..., None]


if __name__ == "__main__":
    B, N, c_z = 2, 8, 32

    key = jax.random.PRNGKey(0)
    k_rbf, k_nf, k_rel, k_mask, k_p = jax.random.split(key, 5)

    distance_rbf = jax.random.normal(k_rbf, (B, N, N, RBF_DIM), jnp.float32)
    nf_pair_emb = jax.random.normal(k_nf, (B, N, N, c_z), jnp.float32)
    relative_pos = jax.random.normal(k_rel, (B, N, N, c_z), jnp.float32)
    pair_mask = (jax.random.uniform(k_mask, (B, N, N)) > 0.2).astype(jnp.float32)

    params = init_params(k_p, c_z)

    out = pair_embedder_forward(distance_rbf, nf_pair_emb, relative_pos,
                                pair_mask, params)
    out = jax.block_until_ready(out)

    ref = reference_forward(distance_rbf, nf_pair_emb, relative_pos,
                            pair_mask, params)
    assert out.shape == (B, N, N, c_z)
    err = float(jnp.max(jnp.abs(out - ref)))
    assert jnp.allclose(out, ref, atol=1e-3, rtol=1e-3), err

    print("KERNEL_OK")
</pallas_src>

<mosaic_0001>
module attributes {stable_mosaic.version = 11 : i64} {
  func.func @_pair_embedder_kernel(%arg0: i32, %arg1: memref<64x17xf32, #tpu.memory_space<vmem>>, %arg2: memref<64x32xf32, #tpu.memory_space<vmem>>, %arg3: memref<64x32xf32, #tpu.memory_space<vmem>>, %arg4: memref<32x128xf32, #tpu.memory_space<vmem>>, %arg5: memref<32x128xf32, #tpu.memory_space<vmem>>, %arg6: memref<17x128xf32, #tpu.memory_space<vmem>>, %arg7: memref<128x128xf32, #tpu.memory_space<vmem>>, %arg8: memref<4x128xf32, #tpu.memory_space<vmem>>, %arg9: memref<64x32xf32, #tpu.memory_space<vmem>>) attributes {dimension_semantics = [#tpu.dimension_semantics<parallel>], iteration_bounds = array<i64: 2>, scalar_prefetch = 0 : i64, scratch_operands = 0 : i64, tpu.core_type = #tpu.core_type<tc>, window_params = [{transform_indices = @transform_0, window_bounds = array<i64: 64, 17>}, {transform_indices = @transform_1, window_bounds = array<i64: 64, 32>}, {transform_indices = @transform_2, window_bounds = array<i64: 64, 32>}, {pipeline_mode = #tpu.pipeline_mode<synchronous>, transform_indices = @transform_3, window_bounds = array<i64: 32, 128>}, {pipeline_mode = #tpu.pipeline_mode<synchronous>, transform_indices = @transform_4, window_bounds = array<i64: 32, 128>}, {pipeline_mode = #tpu.pipeline_mode<synchronous>, transform_indices = @transform_5, window_bounds = array<i64: 17, 128>}, {pipeline_mode = #tpu.pipeline_mode<synchronous>, transform_indices = @transform_6, window_bounds = array<i64: 128, 128>}, {pipeline_mode = #tpu.pipeline_mode<synchronous>, transform_indices = @transform_7, window_bounds = array<i64: 4, 128>}, {transform_indices = @transform_8, window_bounds = array<i64: 64, 32>}]} {
    %c0 = arith.constant 0 : index
    %c0_0 = arith.constant 0 : index
    %0 = vector.load %arg2[%c0, %c0_0] : memref<64x32xf32, #tpu.memory_space<vmem>>, vector<64x32xf32>
    %c0_1 = arith.constant 0 : index
    %c0_2 = arith.constant 0 : index
    %1 = vector.load %arg4[%c0_1, %c0_2] : memref<32x128xf32, #tpu.memory_space<vmem>>, vector<32x128xf32>
    %cst = arith.constant dense<0.000000e+00> : vector<64x128xf32>
    %2 = tpu.matmul %0, %1, %cst {dimension_numbers = #tpu.dot_dimension_numbers<[1], [0], [0], [1], [0, 0, 1, 1], [], []>} : vector<64x32xf32>, vector<32x128xf32>, vector<64x128xf32> -> vector<64x128xf32>
    %c0_3 = arith.constant 0 : index
    %c0_4 = arith.constant 0 : index
    %3 = vector.load %arg3[%c0_3, %c0_4] : memref<64x32xf32, #tpu.memory_space<vmem>>, vector<64x32xf32>
    %c0_5 = arith.constant 0 : index
    %c0_6 = arith.constant 0 : index
    %4 = vector.load %arg5[%c0_5, %c0_6] : memref<32x128xf32, #tpu.memory_space<vmem>>, vector<32x128xf32>
    %cst_7 = arith.constant dense<0.000000e+00> : vector<64x128xf32>
    %5 = tpu.matmul %3, %4, %cst_7 {dimension_numbers = #tpu.dot_dimension_numbers<[1], [0], [0], [1], [0, 0, 1, 1], [], []>} : vector<64x32xf32>, vector<32x128xf32>, vector<64x128xf32> -> vector<64x128xf32>
    %6 = arith.addf %2, %5 : vector<64x128xf32>
    %c0_8 = arith.constant 0 : index
    %c0_9 = arith.constant 0 : index
    %7 = vector.load %arg1[%c0_8, %c0_9] : memref<64x17xf32, #tpu.memory_space<vmem>>, vector<64x17xf32>
    %c0_10 = arith.constant 0 : index
    %c0_11 = arith.constant 0 : index
    %8 = vector.load %arg6[%c0_10, %c0_11] : memref<17x128xf32, #tpu.memory_space<vmem>>, vector<17x128xf32>
    %cst_12 = arith.constant dense<0.000000e+00> : vector<64x128xf32>
    %9 = tpu.matmul %7, %8, %cst_12 {dimension_numbers = #tpu.dot_dimension_numbers<[1], [0], [0], [1], [0, 0, 1, 1], [], []>} : vector<64x17xf32>, vector<17x128xf32>, vector<64x128xf32> -> vector<64x128xf32>
    %10 = arith.addf %6, %9 : vector<64x128xf32>
    %c0_13 = arith.constant 0 : index
    %c0_14 = arith.constant 0 : index
    %11 = vector.load %arg8[%c0_13, %c0_14] : memref<4x128xf32, #tpu.memory_space<vmem>>, vector<1x128xf32>
    %12 = vector.broadcast %11 : vector<1x128xf32> to vector<64x128xf32>
    %13 = arith.addf %10, %12 : vector<64x128xf32>
    %cst_15 = arith.constant 0.000000e+00 : f32
    %14 = vector.broadcast %cst_15 : f32 to vector<64x128xf32>
    %15 = arith.maximumf %13, %14 : vector<64x128xf32>
    %c0_16 = arith.constant 0 : index
    %c0_17 = arith.constant 0 : index
    %16 = vector.load %arg7[%c0_16, %c0_17] : memref<128x128xf32, #tpu.memory_space<vmem>>, vector<128x128xf32>
    %cst_18 = arith.constant dense<0.000000e+00> : vector<64x128xf32>
    %17 = tpu.matmul %15, %16, %cst_18 {dimension_numbers = #tpu.dot_dimension_numbers<[1], [0], [0], [1], [0, 0, 1, 1], [], []>} : vector<64x128xf32>, vector<128x128xf32>, vector<64x128xf32> -> vector<64x128xf32>
    %c1 = arith.constant 1 : index
    %c0_19 = arith.constant 0 : index
    %18 = vector.load %arg8[%c1, %c0_19] : memref<4x128xf32, #tpu.memory_space<vmem>>, vector<1x128xf32>
    %19 = vector.broadcast %18 : vector<1x128xf32> to vector<64x128xf32>
    %20 = arith.addf %17, %19 : vector<64x128xf32>
    %cst_20 = arith.constant dense<0.000000e+00> : vector<64xf32>
    %21 = vector.multi_reduction <add>, %20, %cst_20 [1] : vector<64x128xf32> to vector<64xf32>
    %22 = vector.shape_cast %21 : vector<64xf32> to vector<64x1xf32>
    %23 = arith.mulf %20, %20 : vector<64x128xf32>
    %cst_21 = arith.constant dense<0.000000e+00> : vector<64xf32>
    %24 = vector.multi_reduction <add>, %23, %cst_21 [1] : vector<64x128xf32> to vector<64xf32>
    %25 = vector.shape_cast %24 : vector<64xf32> to vector<64x1xf32>
    %cst_22 = arith.constant 3.125000e-02 : f32
    %26 = vector.broadcast %cst_22 : f32 to vector<64x1xf32>
    %27 = arith.mulf %22, %26 : vector<64x1xf32>
    %cst_23 = arith.constant 3.125000e-02 : f32
    %28 = vector.broadcast %cst_23 : f32 to vector<64x1xf32>
    %29 = arith.mulf %25, %28 : vector<64x1xf32>
    %30 = arith.mulf %27, %27 : vector<64x1xf32>
    %31 = arith.subf %29, %30 : vector<64x1xf32>
    %32 = vector.broadcast %27 : vector<64x1xf32> to vector<64x128xf32>
    %33 = arith.subf %20, %32 : vector<64x128xf32>
    %cst_24 = arith.constant 9.99999974E-6 : f32
    %34 = vector.broadcast %cst_24 : f32 to vector<64x1xf32>
    %35 = arith.addf %31, %34 : vector<64x1xf32>
    %36 = math.rsqrt %35 : vector<64x1xf32>
    %37 = vector.broadcast %36 : vector<64x1xf32> to vector<64x128xf32>
    %38 = arith.mulf %33, %37 : vector<64x128xf32>
    %c2 = arith.constant 2 : index
    %c0_25 = arith.constant 0 : index
    %39 = vector.load %arg8[%c2, %c0_25] : memref<4x128xf32, #tpu.memory_space<vmem>>, vector<1x128xf32>
    %40 = vector.broadcast %39 : vector<1x128xf32> to vector<64x128xf32>
    %41 = arith.mulf %38, %40 : vector<64x128xf32>
    %c3 = arith.constant 3 : index
    %c0_26 = arith.constant 0 : index
    %42 = vector.load %arg8[%c3, %c0_26] : memref<4x128xf32, #tpu.memory_space<vmem>>, vector<1x128xf32>
    %43 = vector.broadcast %42 : vector<1x128xf32> to vector<64x128xf32>
    %44 = arith.addf %41, %43 : vector<64x128xf32>
    %c0_27 = arith.constant 0 : index
    %c16 = arith.constant 16 : index
    %45 = vector.load %arg1[%c0_27, %c16] : memref<64x17xf32, #tpu.memory_space<vmem>>, vector<64x1xf32>
    %46 = vector.extract_strided_slice %44 {offsets = [0, 0], sizes = [64, 32], strides = [1, 1]} : vector<64x128xf32> to vector<64x32xf32>
    %47 = vector.broadcast %45 : vector<64x1xf32> to vector<64x32xf32>
    %48 = arith.mulf %46, %47 : vector<64x32xf32>
    %c0_28 = arith.constant 0 : index
    %c0_29 = arith.constant 0 : index
    %49 = vector.load %arg9[%c0_28, %c0_29] : memref<64x32xf32, #tpu.memory_space<vmem>>, vector<64x32xf32>
    tpu.vector_store %arg9[%c0_28, %c0_29], %48 {strides = array<i32>} : memref<64x32xf32, #tpu.memory_space<vmem>>, vector<64x32xf32>,
    return
  }
  func.func @transform_0(%arg0: i32) -> (i32, i32) {
    %c0_i32 = arith.constant 0 : i32
    %c0_i32_0 = arith.constant 0 : i32
    return %arg0, %c0_i32 : i32, i32
  }
  func.func @transform_1(%arg0: i32) -> (i32, i32) {
    %c0_i32 = arith.constant 0 : i32
    %c0_i32_0 = arith.constant 0 : i32
    return %arg0, %c0_i32 : i32, i32
  }
  func.func @transform_2(%arg0: i32) -> (i32, i32) {
    %c0_i32 = arith.constant 0 : i32
    %c0_i32_0 = arith.constant 0 : i32
    return %arg0, %c0_i32 : i32, i32
  }
  func.func @transform_3(%arg0: i32) -> (i32, i32) {
    %c0_i32 = arith.constant 0 : i32
    %c0_i32_0 = arith.constant 0 : i32
    %c0_i32_1 = arith.constant 0 : i32
    return %c0_i32, %c0_i32_0 : i32, i32
  }
  func.func @transform_4(%arg0: i32) -> (i32, i32) {
    %c0_i32 = arith.constant 0 : i32
    %c0_i32_0 = arith.constant 0 : i32
    %c0_i32_1 = arith.constant 0 : i32
    return %c0_i32, %c0_i32_0 : i32, i32
  }
  func.func @transform_5(%arg0: i32) -> (i32, i32) {
    %c0_i32 = arith.constant 0 : i32
    %c0_i32_0 = arith.constant 0 : i32
    %c0_i32_1 = arith.constant 0 : i32
    return %c0_i32, %c0_i32_0 : i32, i32
  }
  func.func @transform_6(%arg0: i32) -> (i32, i32) {
    %c0_i32 = arith.constant 0 : i32
    %c0_i32_0 = arith.constant 0 : i32
    %c0_i32_1 = arith.constant 0 : i32
    return %c0_i32, %c0_i32_0 : i32, i32
  }
  func.func @transform_7(%arg0: i32) -> (i32, i32) {
    %c0_i32 = arith.constant 0 : i32
    %c0_i32_0 = arith.constant 0 : i32
    %c0_i32_1 = arith.constant 0 : i32
    return %c0_i32, %c0_i32_0 : i32, i32
  }
  func.func @transform_8(%arg0: i32) -> (i32, i32) {
    %c0_i32 = arith.constant 0 : i32
    %c0_i32_0 = arith.constant 0 : i32
    return %arg0, %c0_i32 : i32, i32
  }
}

</mosaic_0001>

<llo_original>
// kernel: tpu_custom_call.1
$region0: #{tpu_custom_call.1}
  #allocation0 [shape = 'u32[]', space=smem, size = 0x4, offset = 0x4, fixed_abs, tag = 'smem constant byte address 0x4 - core index']
  #allocation1 [shape = 'u32[144,128]{1,0:T(1,128)}', space=vmem, size = 0x12000, scoped, tag = 'internal scratch']
  %s0 = inlined_call_operand.vmem [shape: f32[128,17], index: 0, kind: input, shape index: {}]
  %s1 = inlined_call_operand.vmem [shape: f32[128,32], index: 1, kind: input, shape index: {}]
  %s2 = inlined_call_operand.vmem [shape: f32[128,32], index: 2, kind: input, shape index: {}]
  %s3 = inlined_call_operand.vmem [shape: f32[32,128], index: 3, kind: input, shape index: {}]
  %s4 = inlined_call_operand.vmem [shape: f32[32,128], index: 4, kind: input, shape index: {}]
  %s5 = inlined_call_operand.vmem [shape: f32[17,128], index: 5, kind: input, shape index: {}]
  %s6 = inlined_call_operand.vmem [shape: f32[128,128], index: 6, kind: input, shape index: {}]
  %s7 = inlined_call_operand.vmem [shape: f32[4,128], index: 7, kind: input, shape index: {}]
  %s8 = inlined_call_operand.vmem [shape: f32[128,32], index: 8, kind: output, shape index: {}]
  %s9 = sld [smem:[#allocation0]]
  $region65: #{tpu_custom_call.1} parent=0
    _
  %s11 = ssub.s32 1, %s9
  %s12 = scalar_select 0, %s11, %s9
  loop: start=0, step=1, limit=4
  $region2: #{tpu_custom_call.1} parent=0 // loop_pre_header
    _
  $region3: #{tpu_custom_call.1} parent=0 // loop_header
    %s14 = sphi 0, %s18
    %p15 = scmp.ge.s32.totalorder %s14, 4
    %s24 = sphi 0, %s26
    %s27 = sphi 0, %s24
    %s28 = sphi 0, %s27
    %s44 = sphi 0, %s28
    %s50 = sphi 0, %s52
    %s53 = sphi 0, %s50
    %s54 = sphi 0, %s53
    %s70 = sphi 0, %s54
    %s76 = sphi 0, %s78
    %s79 = sphi 0, %s76
    %s80 = sphi 0, %s79
    %s96 = sphi 0, %s80
    %s100 = sphi 0, %s100
    %s102 = sphi 0, %s100
    %s103 = sphi 0, %s102
    %s117 = sphi 0, %s103
    %s121 = sphi 0, %s121
    %s123 = sphi 0, %s121
    %s124 = sphi 0, %s123
    %s138 = sphi 0, %s124
    %s142 = sphi 0, %s142
    %s144 = sphi 0, %s142
    %s145 = sphi 0, %s144
    %s159 = sphi 0, %s145
    %s163 = sphi 0, %s163
    %s165 = sphi 0, %s163
    %s166 = sphi 0, %s165
    %s180 = sphi 0, %s166
    %s184 = sphi 0, %s184
    %s186 = sphi 0, %s184
    %s187 = sphi 0, %s186
    %s201 = sphi 0, %s187
    %s207 = sphi 0, %s209
    %s210 = sphi 0, %s207
    %s211 = sphi 0, %s210
    %s227 = sphi 0, %s211
  $region4: #{tpu_custom_call.1} parent=0 // loop_header_branch
    %17 = sbr.rel (%p15) target = $region8
  $region5: #{tpu_custom_call.1} parent=0 // loop_body
    %s19 = ssub.s32 %s14, 1
    %s20 = ssub.s32 %s14, 2
    %s21 = sadd.s32 %s14, 1
    %s22 = ssub.s32 %s14, %s21
    %p23 = scmp.eq.s32.totalorder %s22, 0
    %s25 = sadd.s32 %s24, 1
    %s26 = scalar_select %p23, %s24, %s25
    %p29 = pneg %p23
    %p30 = scmp.eq.s32.totalorder %s14, 1
    %p31 = por %p29, %p30
    %p32 = scmp.ne.s32.totalorder %s24, %s27
    %p33 = scmp.eq.s32.totalorder %s14, 0
    %p34 = por %p32, %p33
    %p35 = scmp.ne.s32.totalorder %s24, %s27
    %p36 = scmp.eq.s32.totalorder %s19, 1
    %p37 = por %p35, %p36
    %p38 = scmp.ne.s32.totalorder %s27, %s28
    %p39 = scmp.eq.s32.totalorder %s19, 0
    %p40 = por %p38, %p39
    %p41 = scmp.ne.s32.totalorder %s27, %s28
    %p42 = scmp.eq.s32.totalorder %s20, 1
    %p43 = por %p41, %p42
    %p45 = scmp.ne.s32.totalorder %s28, %s44
    %p46 = scmp.eq.s32.totalorder %s20, 0
    %p47 = por %p45, %p46
    %s48 = ssub.s32 %s14, %s21
    %p49 = scmp.eq.s32.totalorder %s48, 0
    %s51 = sadd.s32 %s50, 1
    %s52 = scalar_select %p49, %s50, %s51
    %p55 = pneg %p49
    %p56 = scmp.eq.s32.totalorder %s14, 1
    %p57 = por %p55, %p56
    %p58 = scmp.ne.s32.totalorder %s50, %s53
    %p59 = scmp.eq.s32.totalorder %s14, 0
    %p60 = por %p58, %p59
    %p61 = scmp.ne.s32.totalorder %s50, %s53
    %p62 = scmp.eq.s32.totalorder %s19, 1
    %p63 = por %p61, %p62
    %p64 = scmp.ne.s32.totalorder %s53, %s54
    %p65 = scmp.eq.s32.totalorder %s19, 0
    %p66 = por %p64, %p65
    %p67 = scmp.ne.s32.totalorder %s53, %s54
    %p68 = scmp.eq.s32.totalorder %s20, 1
    %p69 = por %p67, %p68
    %p71 = scmp.ne.s32.totalorder %s54, %s70
    %p72 = scmp.eq.s32.totalorder %s20, 0
    %p73 = por %p71, %p72
    %s74 = ssub.s32 %s14, %s21
    %p75 = scmp.eq.s32.totalorder %s74, 0
    %s77 = sadd.s32 %s76, 1
    %s78 = scalar_select %p75, %s76, %s77
    %p81 = pneg %p75
    %p82 = scmp.eq.s32.totalorder %s14, 1
    %p83 = por %p81, %p82
    %p84 = scmp.ne.s32.totalorder %s76, %s79
    %p85 = scmp.eq.s32.totalorder %s14, 0
    %p86 = por %p84, %p85
    %p87 = scmp.ne.s32.totalorder %s76, %s79
    %p88 = scmp.eq.s32.totalorder %s19, 1
    %p89 = por %p87, %p88
    %p90 = scmp.ne.s32.totalorder %s79, %s80
    %p91 = scmp.eq.s32.totalorder %s19, 0
    %p92 = por %p90, %p91
    %p93 = scmp.ne.s32.totalorder %s79, %s80
    %p94 = scmp.eq.s32.totalorder %s20, 1
    %p95 = por %p93, %p94
    %p97 = scmp.ne.s32.totalorder %s80, %s96
    %p98 = scmp.eq.s32.totalorder %s20, 0
    %p99 = por %p97, %p98
    %s101 = sadd.s32 %s100, 1
    %p104 = scmp.eq.s32.totalorder %s14, 1
    %p105 = scmp.ne.s32.totalorder %s100, %s102
    %p106 = scmp.eq.s32.totalorder %s14, 0
    %p107 = por %p105, %p106
    %p108 = scmp.ne.s32.totalorder %s100, %s102
    %p109 = scmp.eq.s32.totalorder %s19, 1
    %p110 = por %p108, %p109
    %p111 = scmp.ne.s32.totalorder %s102, %s103
    %p112 = scmp.eq.s32.totalorder %s19, 0
    %p113 = por %p111, %p112
    %p114 = scmp.ne.s32.totalorder %s102, %s103
    %p115 = scmp.eq.s32.totalorder %s20, 1
    %p116 = por %p114, %p115
    %p118 = scmp.ne.s32.totalorder %s103, %s117
    %p119 = scmp.eq.s32.totalorder %s20, 0
    %p120 = por %p118, %p119
    %s122 = sadd.s32 %s121, 1
    %p125 = scmp.eq.s32.totalorder %s14, 1
    %p126 = scmp.ne.s32.totalorder %s121, %s123
    %p127 = scmp.eq.s32.totalorder %s14, 0
    %p128 = por %p126, %p127
    %p129 = scmp.ne.s32.totalorder %s121, %s123
    %p130 = scmp.eq.s32.totalorder %s19, 1
    %p131 = por %p129, %p130
    %p132 = scmp.ne.s32.totalorder %s123, %s124
    %p133 = scmp.eq.s32.totalorder %s19, 0
    %p134 = por %p132, %p133
    %p135 = scmp.ne.s32.totalorder %s123, %s124
    %p136 = scmp.eq.s32.totalorder %s20, 1
    %p137 = por %p135, %p136
    %p139 = scmp.ne.s32.totalorder %s124, %s138
    %p140 = scmp.eq.s32.totalorder %s20, 0
    %p141 = por %p139, %p140
    %s143 = sadd.s32 %s142, 1
    %p146 = scmp.eq.s32.totalorder %s14, 1
    %p147 = scmp.ne.s32.totalorder %s142, %s144
    %p148 = scmp.eq.s32.totalorder %s14, 0
    %p149 = por %p147, %p148
    %p150 = scmp.ne.s32.totalorder %s142, %s144
    %p151 = scmp.eq.s32.totalorder %s19, 1
    %p152 = por %p150, %p151
    %p153 = scmp.ne.s32.totalorder %s144, %s145
    %p154 = scmp.eq.s32.totalorder %s19, 0
    %p155 = por %p153, %p154
    %p156 = scmp.ne.s32.totalorder %s144, %s145
    %p157 = scmp.eq.s32.totalorder %s20, 1
    %p158 = por %p156, %p157
    %p160 = scmp.ne.s32.totalorder %s145, %s159
    %p161 = scmp.eq.s32.totalorder %s20, 0
    %p162 = por %p160, %p161
    %s164 = sadd.s32 %s163, 1
    %p167 = scmp.eq.s32.totalorder %s14, 1
    %p168 = scmp.ne.s32.totalorder %s163, %s165
    %p169 = scmp.eq.s32.totalorder %s14, 0
    %p170 = por %p168, %p169
    %p171 = scmp.ne.s32.totalorder %s163, %s165
    %p172 = scmp.eq.s32.totalorder %s19, 1
    %p173 = por %p171, %p172
    %p174 = scmp.ne.s32.totalorder %s165, %s166
    %p175 = scmp.eq.s32.totalorder %s19, 0
    %p176 = por %p174, %p175
    %p177 = scmp.ne.s32.totalorder %s165, %s166
    %p178 = scmp.eq.s32.totalorder %s20, 1
    %p179 = por %p177, %p178
    %p181 = scmp.ne.s32.totalorder %s166, %s180
    %p182 = scmp.eq.s32.totalorder %s20, 0
    %p183 = por %p181, %p182
    %s185 = sadd.s32 %s184, 1
    %p188 = scmp.eq.s32.totalorder %s14, 1
    %p189 = scmp.ne.s32.totalorder %s184, %s186
    %p190 = scmp.eq.s32.totalorder %s14, 0
    %p191 = por %p189, %p190
    %p192 = scmp.ne.s32.totalorder %s184, %s186
    %p193 = scmp.eq.s32.totalorder %s19, 1
    %p194 = por %p192, %p193
    %p195 = scmp.ne.s32.totalorder %s186, %s187
    %p196 = scmp.eq.s32.totalorder %s19, 0
    %p197 = por %p195, %p196
    %p198 = scmp.ne.s32.totalorder %s186, %s187
    %p199 = scmp.eq.s32.totalorder %s20, 1
    %p200 = por %p198, %p199
    %p202 = scmp.ne.s32.totalorder %s187, %s201
    %p203 = scmp.eq.s32.totalorder %s20, 0
    %p204 = por %p202, %p203
    %s205 = ssub.s32 %s14, %s21
    %p206 = scmp.eq.s32.totalorder %s205, 0
    %s208 = sadd.s32 %s207, 1
    %s209 = scalar_select %p206, %s207, %s208
    %p212 = pneg %p206
    %p213 = scmp.eq.s32.totalorder %s14, 1
    %p214 = por %p212, %p213
    %p215 = scmp.ne.s32.totalorder %s207, %s210
    %p216 = scmp.eq.s32.totalorder %s14, 0
    %p217 = por %p215, %p216
    %p218 = scmp.ne.s32.totalorder %s207, %s210
    %p219 = scmp.eq.s32.totalorder %s19, 1
    %p220 = por %p218, %p219
    %p221 = scmp.ne.s32.totalorder %s210, %s211
    %p222 = scmp.eq.s32.totalorder %s19, 0
    %p223 = por %p221, %p222
    %p224 = scmp.ne.s32.totalorder %s210, %s211
    %p225 = scmp.eq.s32.totalorder %s20, 1
    %p226 = por %p224, %p225
    %p228 = scmp.ne.s32.totalorder %s211, %s227
    %p229 = scmp.eq.s32.totalorder %s20, 0
    %p230 = por %p228, %p229
    %p231 = scmp.le.s32.totalorder 1, %s14
    %p232 = scmp.lt.s32.totalorder %s14, 3
    %p233 = pnand %p231, %p232
    %p234 = pneg %p233
    // Predicated region
    $region9: #{tpu_custom_call.1} parent=5 // pred_check
      _
    $region10: #{tpu_custom_call.1} parent=5 // pred_check_branch
      %236 = sbr.rel (%p233) target = $region12
    $region11: #{tpu_custom_call.1} parent=5 // pred_region
      %s237 = ssub.s32 %s14, 1
      // Predicated region
      $region13: #{tpu_custom_call.1} parent=11 // pred_check
        %p238 = pneg %p113
      $region14: #{tpu_custom_call.1} parent=11 // pred_check_branch
        %240 = sbr.rel (%p238) target = $region16
      $region15: #{tpu_custom_call.1} parent=11 // pred_region
        _
      $region16: #{tpu_custom_call.1} parent=11 // pred_fallthru
        _
      // Predicated region
      $region17: #{tpu_custom_call.1} parent=11 // pred_check
        %p241 = pneg %p134
      $region18: #{tpu_custom_call.1} parent=11 // pred_check_branch
        %243 = sbr.rel (%p241) target = $region20
      $region19: #{tpu_custom_call.1} parent=11 // pred_region
        _
      $region20: #{tpu_custom_call.1} parent=11 // pred_fallthru
        _
      // Predicated region
      $region21: #{tpu_custom_call.1} parent=11 // pred_check
        %p244 = pneg %p155
      $region22: #{tpu_custom_call.1} parent=11 // pred_check_branch
        %246 = sbr.rel (%p244) target = $region24
      $region23: #{tpu_custom_call.1} parent=11 // pred_region
        _
      $region24: #{tpu_custom_call.1} parent=11 // pred_fallthru
        _
      // Predicated region
      $region25: #{tpu_custom_call.1} parent=11 // pred_check
        %p247 = pneg %p176
      $region26: #{tpu_custom_call.1} parent=11 // pred_check_branch
        %249 = sbr.rel (%p247) target = $region28
      $region27: #{tpu_custom_call.1} parent=11 // pred_region
        _
      $region28: #{tpu_custom_call.1} parent=11 // pred_fallthru
        _
      // Predicated region
      $region29: #{tpu_custom_call.1} parent=11 // pred_check
        %p250 = pneg %p197
      $region30: #{tpu_custom_call.1} parent=11 // pred_check_branch
        %252 = sbr.rel (%p250) target = $region32
      $region31: #{tpu_custom_call.1} parent=11 // pred_region
        _
      $region32: #{tpu_custom_call.1} parent=11 // pred_fallthru
        _
    $region12: #{tpu_custom_call.1} parent=5 // pred_fallthru
      _
    %p253 = scmp.lt.s32.totalorder %s14, 2
    // Predicated region
    $region33: #{tpu_custom_call.1} parent=5 // pred_check
      %p254 = pneg %p253
    $region34: #{tpu_custom_call.1} parent=5 // pred_check_branch
      %256 = sbr.rel (%p254) target = $region36
    $region35: #{tpu_custom_call.1} parent=5 // pred_region
      // Predicated region
      $region37: #{tpu_custom_call.1} parent=35 // pred_check
        %p257 = pneg %p34
      $region38: #{tpu_custom_call.1} parent=35 // pred_check_branch
        %259 = sbr.rel (%p257) target = $region40
      $region39: #{tpu_custom_call.1} parent=35 // pred_region
        %s260 = smul.u32 8, %s14
        %p261 = scmp.lt.s32.totalorder %s260, 15
        %s262 = scalar_select %p261, %s260, 15
        %s263 = smul.addr %s262, 8
        %s264 = scalar_lea.vmem %s0, %s263
        %s265 = smul.u32 8, %s14
      $region40: #{tpu_custom_call.1} parent=35 // pred_fallthru
        _
      // Predicated region
      $region41: #{tpu_custom_call.1} parent=35 // pred_check
        %p266 = pneg %p60
      $region42: #{tpu_custom_call.1} parent=35 // pred_check_branch
        %268 = sbr.rel (%p266) target = $region44
      $region43: #{tpu_custom_call.1} parent=35 // pred_region
        %s269 = smul.u32 8, %s14
        %p270 = scmp.lt.s32.totalorder %s269, 15
        %s271 = scalar_select %p270, %s269, 15
        %s272 = smul.addr %s271, 8
        %s273 = scalar_lea.vmem %s1, %s272
        %s274 = smul.u32 8, %s14
      $region44: #{tpu_custom_call.1} parent=35 // pred_fallthru
        _
      // Predicated region
      $region45: #{tpu_custom_call.1} parent=35 // pred_check
        %p275 = pneg %p86
      $region46: #{tpu_custom_call.1} parent=35 // pred_check_branch
        %277 = sbr.rel (%p275) target = $region48
      $region47: #{tpu_custom_call.1} parent=35 // pred_region
        %s278 = smul.u32 8, %s14
        %p279 = scmp.lt.s32.totalorder %s278, 15
        %s280 = scalar_select %p279, %s278, 15
        %s281 = smul.addr %s280, 8
        %s282 = scalar_lea.vmem %s2, %s281
        %s283 = smul.u32 8, %s14
      $region48: #{tpu_custom_call.1} parent=35 // pred_fallthru
        _
    $region36: #{tpu_custom_call.1} parent=5 // pred_fallthru
      _
    %p284 = scmp.le.s32.totalorder 1, %s14
    %p285 = scmp.lt.s32.totalorder %s14, 3
    %p286 = pnand %p284, %p285
    %p287 = pneg %p286
    // Predicated region
    $region49: #{tpu_custom_call.1} parent=5 // pred_check
      _
    $region50: #{tpu_custom_call.1} parent=5 // pred_check_branch
      %289 = sbr.rel (%p286) target = $region52
    $region51: #{tpu_custom_call.1} parent=5 // pred_region
      %s290 = ssub.s32 %s14, 1
      %s291 = smul.u32 8, %s19
      %p292 = scmp.lt.s32.totalorder %s291, 15
      %s293 = scalar_select %p292, %s291, 15
      %s294 = smul.addr %s293, 8
      %s295 = scalar_lea.vmem %s0, %s294
      %p296 = pneg %p40
      %p297 = pneg %p37
      %s298 = smul.u32 8, %s19
      %p299 = scmp.lt.s32.totalorder %s298, 15
      %s300 = scalar_select %p299, %s298, 15
      %s301 = smul.addr %s300, 8
      %s302 = scalar_lea.vmem %s1, %s301
      %p303 = pneg %p66
      %p304 = pneg %p63
      %s305 = smul.u32 8, %s19
      %p306 = scmp.lt.s32.totalorder %s305, 15
      %s307 = scalar_select %p306, %s305, 15
      %s308 = smul.addr %s307, 8
      %s309 = scalar_lea.vmem %s2, %s308
      %p310 = pneg %p92
      %p311 = pneg %p89
      %p312 = pneg %p113
      %p313 = pneg %p110
      %p314 = pneg %p134
      %p315 = pneg %p131
      %p316 = pneg %p155
      %p317 = pneg %p152
      %p318 = pneg %p176
      %p319 = pneg %p173
      %p320 = pneg %p197
      %p321 = pneg %p194
      %p322 = pneg %p223
      %p323 = pneg %p220
      %s324 = smul.u32 8, %s19
      %p325 = scmp.lt.s32.totalorder %s324, 15
      %s326 = scalar_select %p325, %s324, 15
      %s327 = smul.addr %s326, 8
      %s328 = scalar_lea.vmem %s8, %s327
      %s329 = smul.u32 8, %s19
      %p330 = scmp.lt.s32.totalorder %s329, 15
      %s331 = scalar_select %p330, %s329, 15
      %s332 = smul.addr %s331, 8
      %s333 = scalar_lea.vmem %s0, %s332
      %s334 = smul.u32 8, %s19
      %s335 = smul.u32 8, %s19
      %p336 = scmp.lt.s32.totalorder %s335, 15
      %s337 = scalar_select %p336, %s335, 15
      %s338 = smul.addr %s337, 8
      %s339 = scalar_lea.vmem %s1, %s338
      %s340 = smul.u32 8, %s19
      %s341 = smul.u32 8, %s19
      %p342 = scmp.lt.s32.totalorder %s341, 15
      %s343 = scalar_select %p342, %s341, 15
      %s344 = smul.addr %s343, 8
      %s345 = scalar_lea.vmem %s2, %s344
      %s346 = smul.u32 8, %s19
      %s347 = smul.u32 8, %s19
      %p348 = scmp.lt.s32.totalorder %s347, 15
      %s349 = scalar_select %p348, %s347, 15
      %s350 = smul.addr %s349, 8
      %s351 = scalar_lea.vmem %s8, %s350
      %s352 = smul.u32 8, %s19
      %v353 = vld [vmem:[%s339] sm:$0xff]
      %v354 = vld [vmem:[%s339 + $0x8] sm:$0xff]
      %v355 = vld [vmem:[%s339 + $0x10] sm:$0xff]
      %v356 = vld [vmem:[%s339 + $0x18] sm:$0xff]
      %v357 = vld [vmem:[%s339 + $0x20] sm:$0xff]
      %v358 = vld [vmem:[%s339 + $0x28] sm:$0xff]
      %v359 = vld [vmem:[%s339 + $0x30] sm:$0xff]
      %v360 = vld [vmem:[%s339 + $0x38] sm:$0xff]
      %v361 = vld [vmem:[%s3] sm:$0xff]
      %v362 = vld [vmem:[%s3 + $0x8] sm:$0xff]
      %v363 = vld [vmem:[%s3 + $0x10] sm:$0xff]
      %v364 = vld [vmem:[%s3 + $0x18] sm:$0xff]
      %v365 = vld [vmem:[%s345] sm:$0xff]
      %v366 = vld [vmem:[%s345 + $0x8] sm:$0xff]
      %v367 = vld [vmem:[%s345 + $0x10] sm:$0xff]
      %v368 = vld [vmem:[%s345 + $0x18] sm:$0xff]
      %v369 = vld [vmem:[%s345 + $0x20] sm:$0xff]
      %v370 = vld [vmem:[%s345 + $0x28] sm:$0xff]
      %v371 = vld [vmem:[%s345 + $0x30] sm:$0xff]
      %v372 = vld [vmem:[%s345 + $0x38] sm:$0xff]
      %v373 = vld [vmem:[%s4] sm:$0xff]
      %v374 = vld [vmem:[%s4 + $0x8] sm:$0xff]
      %v375 = vld [vmem:[%s4 + $0x10] sm:$0xff]
      %v376 = vld [vmem:[%s4 + $0x18] sm:$0xff]
      %vm377 = vcmask 261120
      %v379 = vsel %vm377, %v365, 0
      %v382 = vsel %vm377, %v366, 0
      %v385 = vsel %vm377, %v367, 0
      %v388 = vsel %vm377, %v368, 0
      %v391 = vsel %vm377, %v369, 0
      %v394 = vsel %vm377, %v370, 0
      %v397 = vsel %vm377, %v371, 0
      %v400 = vsel %vm377, %v372, 0
      %402 = vmatprep.subr.mxu0 0.0
      %403 = vmatpush1.msra.mxu0 0.0
      %404 = vmatprep.subr.mxu0 0.0
      %405 = vmatpush1.msra.mxu0 0.0
      %406 = vmatprep.subr.mxu0 0.0
      %407 = vmatpush1.msra.mxu0 0.0
      %408 = vmatprep.subr.mxu0 0.0
      %409 = vmatpush1.msra.mxu0 0.0
      %410 = vmatprep.subr.mxu0 0.0
      %411 = vmatpush1.msra.mxu0 0.0
      %412 = vmatprep.subr.mxu0 0.0
      %413 = vmatpush1.msra.mxu0 0.0
      %414 = vmatprep.subr.mxu0 0.0
      %415 = vmatpush1.msra.mxu0 0.0
      %416 = vmatprep.subr.mxu0 0.0
      %417 = vmatpush1.msra.mxu0 0.0
      %418 = vmatprep.subr.mxu0 0.0
      %419 = vmatpush1.msra.mxu0 0.0
      %420 = vmatprep.subr.mxu0 0.0
      %421 = vmatpush1.msra.mxu0 0.0
      %422 = vmatprep.subr.mxu0 0.0
      %423 = vmatpush1.msra.mxu0 0.0
      %424 = vmatprep.subr.mxu0 0.0
      %425 = vmatpush1.msra.mxu0 0.0
      %426 = vmatprep.subr.mxu0 0.0
      %427 = vmatpush1.msra.mxu0 %v376
      %428 = vmatprep.subr.mxu0 0.0
      %429 = vmatpush1.msra.mxu0 %v375
      %430 = vmatprep.subr.mxu0 0.0
      %431 = vmatpush1.msra.mxu0 %v374
      %432 = vmatprep.subr.mxu0 0.0
      %433 = vmatpush1.msra.mxu0 %v373
      %434 = vmatprep.subr.mxu0 0.0
      %435 = vmatpush2.msra.mxu0 0.0
      %436 = vmatprep.subr.mxu0 0.0
      %437 = vmatpush2.msra.mxu0 0.0
      %438 = vmatprep.subr.mxu0 0.0
      %439 = vmatpush2.msra.mxu0 0.0
      %440 = vmatprep.subr.mxu0 0.0
      %441 = vmatpush2.msra.mxu0 0.0
      %442 = vmatprep.subr.mxu0 0.0
      %443 = vmatpush2.msra.mxu0 0.0
      %444 = vmatprep.subr.mxu0 0.0
      %445 = vmatpush2.msra.mxu0 0.0
      %446 = vmatprep.subr.mxu0 0.0
      %447 = vmatpush2.msra.mxu0 0.0
      %448 = vmatprep.subr.mxu0 0.0
      %449 = vmatpush2.msra.mxu0 0.0
      %450 = vmatprep.subr.mxu0 0.0
      %451 = vmatpush2.msra.mxu0 0.0
      %452 = vmatprep.subr.mxu0 0.0
      %453 = vmatpush2.msra.mxu0 0.0
      %454 = vmatprep.subr.mxu0 0.0
      %455 = vmatpush2.msra.mxu0 0.0
      %456 = vmatprep.subr.mxu0 0.0
      %457 = vmatpush2.msra.mxu0 0.0
      %458 = vmatprep.subr.mxu0 0.0
      %459 = vmatpush2.msra.mxu0 0.0
      %460 = vmatprep.subr.mxu0 0.0
      %461 = vmatpush2.msra.mxu0 0.0
      %462 = vmatprep.subr.mxu0 0.0
      %463 = vmatpush2.msra.mxu0 0.0
      %464 = vmatprep.subr.mxu0 0.0
      %465 = vmatpush2.msra.mxu0 0.0
      %466 = vmatprep.mubr.f32.mxu0 0.0
      %467 = vmatmul.mubr.f32.gmra.mxu0 %v379
      %v468 = vpop.f32.mrf.mxu0
      %v469 = vadd.f32 0.0, %v468
      %v470 = vpop.f32.mrf.mxu0
      %471 = vmatprep.mubr.f32.mxu0 0.0
      %472 = vmatmul.mubr.f32.gmra.mxu0 %v382
      %v473 = vpop.f32.mrf.mxu0
      %v474 = vadd.f32 0.0, %v473
      %v475 = vpop.f32.mrf.mxu0
      %476 = vmatprep.mubr.f32.mxu0 0.0
      %477 = vmatmul.mubr.f32.gmra.mxu0 %v385
      %v478 = vpop.f32.mrf.mxu0
      %v479 = vadd.f32 0.0, %v478
      %v480 = vpop.f32.mrf.mxu0
      %481 = vmatprep.mubr.f32.mxu0 0.0
      %482 = vmatmul.mubr.f32.gmra.mxu0 %v388
      %v483 = vpop.f32.mrf.mxu0
      %v484 = vadd.f32 0.0, %v483
      %v485 = vpop.f32.mrf.mxu0
      %486 = vmatprep.mubr.f32.mxu0 0.0
      %487 = vmatmul.mubr.f32.gmra.mxu0 %v391
      %v488 = vpop.f32.mrf.mxu0
      %v489 = vadd.f32 0.0, %v488
      %v490 = vpop.f32.mrf.mxu0
      %491 = vmatprep.mubr.f32.mxu0 0.0
      %492 = vmatmul.mubr.f32.gmra.mxu0 %v394
      %v493 = vpop.f32.mrf.mxu0
      %v494 = vadd.f32 0.0, %v493
      %v495 = vpop.f32.mrf.mxu0
      %496 = vmatprep.mubr.f32.mxu0 0.0
      %497 = vmatmul.mubr.f32.gmra.mxu0 %v397
      %v498 = vpop.f32.mrf.mxu0
      %v499 = vadd.f32 0.0, %v498
      %v500 = vpop.f32.mrf.mxu0
      %501 = vmatprep.mubr.f32.mxu0 0.0
      %502 = vmatmul.mubr.f32.gmra.mxu0 %v400
      %v503 = vpop.f32.mrf.mxu0
      %v504 = vadd.f32 0.0, %v503
      %v505 = vpop.f32.mrf.mxu0
      %506 = vdwg.mxu0
      %v508 = vsel %vm377, %v353, 0
      %v511 = vsel %vm377, %v354, 0
      %v514 = vsel %vm377, %v355, 0
      %v517 = vsel %vm377, %v356, 0
      %v520 = vsel %vm377, %v357, 0
      %v523 = vsel %vm377, %v358, 0
      %v526 = vsel %vm377, %v359, 0
      %v529 = vsel %vm377, %v360, 0
      %531 = vmatprep.subr.mxu0 0.0
      %532 = vmatpush1.msra.mxu0 0.0
      %533 = vmatprep.subr.mxu0 0.0
      %534 = vmatpush1.msra.mxu0 0.0
      %535 = vmatprep.subr.mxu0 0.0
      %536 = vmatpush1.msra.mxu0 0.0
      %537 = vmatprep.subr.mxu0 0.0
      %538 = vmatpush1.msra.mxu0 0.0
      %539 = vmatprep.subr.mxu0 0.0
      %540 = vmatpush1.msra.mxu0 0.0
      %541 = vmatprep.subr.mxu0 0.0
      %542 = vmatpush1.msra.mxu0 0.0
      %543 = vmatprep.subr.mxu0 0.0
      %544 = vmatpush1.msra.mxu0 0.0
      %545 = vmatprep.subr.mxu0 0.0
      %546 = vmatpush1.msra.mxu0 0.0
      %547 = vmatprep.subr.mxu0 0.0
      %548 = vmatpush1.msra.mxu0 0.0
      %549 = vmatprep.subr.mxu0 0.0
      %550 = vmatpush1.msra.mxu0 0.0
      %551 = vmatprep.subr.mxu0 0.0
      %552 = vmatpush1.msra.mxu0 0.0
      %553 = vmatprep.subr.mxu0 0.0
      %554 = vmatpush1.msra.mxu0 0.0
      %555 = vmatprep.subr.mxu0 0.0
      %556 = vmatpush1.msra.mxu0 %v364
      %557 = vmatprep.subr.mxu0 0.0
      %558 = vmatpush1.msra.mxu0 %v363
      %559 = vmatprep.subr.mxu0 0.0
      %560 = vmatpush1.msra.mxu0 %v362
      %561 = vmatprep.subr.mxu0 0.0
      %562 = vmatpush1.msra.mxu0 %v361
      %563 = vmatprep.subr.mxu0 0.0
      %564 = vmatpush2.msra.mxu0 0.0
      %565 = vmatprep.subr.mxu0 0.0
      %566 = vmatpush2.msra.mxu0 0.0
      %567 = vmatprep.subr.mxu0 0.0
      %568 = vmatpush2.msra.mxu0 0.0
      %569 = vmatprep.subr.mxu0 0.0
      %570 = vmatpush2.msra.mxu0 0.0
      %571 = vmatprep.subr.mxu0 0.0
      %572 = vmatpush2.msra.mxu0 0.0
      %573 = vmatprep.subr.mxu0 0.0
      %574 = vmatpush2.msra.mxu0 0.0
      %575 = vmatprep.subr.mxu0 0.0
      %576 = vmatpush2.msra.mxu0 0.0
      %577 = vmatprep.subr.mxu0 0.0
      %578 = vmatpush2.msra.mxu0 0.0
      %579 = vmatprep.subr.mxu0 0.0
      %580 = vmatpush2.msra.mxu0 0.0
      %581 = vmatprep.subr.mxu0 0.0
      %582 = vmatpush2.msra.mxu0 0.0
      %583 = vmatprep.subr.mxu0 0.0
      %584 = vmatpush2.msra.mxu0 0.0
      %585 = vmatprep.subr.mxu0 0.0
      %586 = vmatpush2.msra.mxu0 0.0
      %587 = vmatprep.subr.mxu0 0.0
      %588 = vmatpush2.msra.mxu0 0.0
      %589 = vmatprep.subr.mxu0 0.0
      %590 = vmatpush2.msra.mxu0 0.0
      %591 = vmatprep.subr.mxu0 0.0
      %592 = vmatpush2.msra.mxu0 0.0
      %593 = vmatprep.subr.mxu0 0.0
      %594 = vmatpush2.msra.mxu0 0.0
      %595 = vmatprep.mubr.f32.mxu0 0.0
      %596 = vmatmul.mubr.f32.gmra.mxu0 %v508
      %v597 = vpop.f32.mrf.mxu0
      %v598 = vadd.f32 %v469, %v597
      %v599 = vpop.f32.mrf.mxu0
      %600 = vmatprep.mubr.f32.mxu0 0.0
      %601 = vmatmul.mubr.f32.gmra.mxu0 %v511
      %v602 = vpop.f32.mrf.mxu0
      %v603 = vadd.f32 %v474, %v602
      %v604 = vpop.f32.mrf.mxu0
      %605 = vmatprep.mubr.f32.mxu0 0.0
      %606 = vmatmul.mubr.f32.gmra.mxu0 %v514
      %v607 = vpop.f32.mrf.mxu0
      %v608 = vadd.f32 %v479, %v607
      %v609 = vpop.f32.mrf.mxu0
      %610 = vmatprep.mubr.f32.mxu0 0.0
      %611 = vmatmul.mubr.f32.gmra.mxu0 %v517
      %v612 = vpop.f32.mrf.mxu0
      %v613 = vadd.f32 %v484, %v612
      %v614 = vpop.f32.mrf.mxu0
      %615 = vmatprep.mubr.f32.mxu0 0.0
      %616 = vmatmul.mubr.f32.gmra.mxu0 %v520
      %v617 = vpop.f32.mrf.mxu0
      %v618 = vadd.f32 %v489, %v617
      %v619 = vpop.f32.mrf.mxu0
      %620 = vmatprep.mubr.f32.mxu0 0.0
      %621 = vmatmul.mubr.f32.gmra.mxu0 %v523
      %v622 = vpop.f32.mrf.mxu0
      %v623 = vadd.f32 %v494, %v622
      %v624 = vpop.f32.mrf.mxu0
      %625 = vmatprep.mubr.f32.mxu0 0.0
      %626 = vmatmul.mubr.f32.gmra.mxu0 %v526
      %v627 = vpop.f32.mrf.mxu0
      %v628 = vadd.f32 %v499, %v627
      %v629 = vpop.f32.mrf.mxu0
      %630 = vmatprep.mubr.f32.mxu0 0.0
      %631 = vmatmul.mubr.f32.gmra.mxu0 %v529
      %v632 = vpop.f32.mrf.mxu0
      %v633 = vadd.f32 %v504, %v632
      %v634 = vpop.f32.mrf.mxu0
      %635 = vdwg.mxu0
      %v636 = vld [vmem:[%s333] sm:$0xff]
      %v637 = vld [vmem:[%s333 + $0x8] sm:$0xff]
      %v638 = vld [vmem:[%s333 + $0x10] sm:$0xff]
      %v639 = vld [vmem:[%s333 + $0x18] sm:$0xff]
      %v640 = vld [vmem:[%s333 + $0x20] sm:$0xff]
      %v641 = vld [vmem:[%s333 + $0x28] sm:$0xff]
      %v642 = vld [vmem:[%s333 + $0x30] sm:$0xff]
      %v643 = vld [vmem:[%s333 + $0x38] sm:$0xff]
      %v644 = vld [vmem:[%s5] sm:$0xff]
      %v645 = vld [vmem:[%s5 + $0x8] sm:$0xff]
      %v646 = vld [vmem:[%s5 + $0x10] sm:$0x1]
      %vm647 = vcmask 138240
      %v649 = vsel %vm647, %v636, 0
      %v652 = vsel %vm647, %v637, 0
      %v655 = vsel %vm647, %v638, 0
      %v658 = vsel %vm647, %v639, 0
      %v661 = vsel %vm647, %v640, 0
      %v664 = vsel %vm647, %v641, 0
      %v667 = vsel %vm647, %v642, 0
      %v670 = vsel %vm647, %v643, 0
      %vm672 = vcmask 1040384
      %v674 = vsel %vm672, %v646, 0
      %676 = vmatprep.subr.mxu0 0.0
      %677 = vmatpush1.msra.mxu0 0.0
      %678 = vmatprep.subr.mxu0 0.0
      %679 = vmatpush1.msra.mxu0 0.0
      %680 = vmatprep.subr.mxu0 0.0
      %681 = vmatpush1.msra.mxu0 0.0
      %682 = vmatprep.subr.mxu0 0.0
      %683 = vmatpush1.msra.mxu0 0.0
      %684 = vmatprep.subr.mxu0 0.0
      %685 = vmatpush1.msra.mxu0 0.0
      %686 = vmatprep.subr.mxu0 0.0
      %687 = vmatpush1.msra.mxu0 0.0
      %688 = vmatprep.subr.mxu0 0.0
      %689 = vmatpush1.msra.mxu0 0.0
      %690 = vmatprep.subr.mxu0 0.0
      %691 = vmatpush1.msra.mxu0 0.0
      %692 = vmatprep.subr.mxu0 0.0
      %693 = vmatpush1.msra.mxu0 0.0
      %694 = vmatprep.subr.mxu0 0.0
      %695 = vmatpush1.msra.mxu0 0.0
      %696 = vmatprep.subr.mxu0 0.0
      %697 = vmatpush1.msra.mxu0 0.0
      %698 = vmatprep.subr.mxu0 0.0
      %699 = vmatpush1.msra.mxu0 0.0
      %700 = vmatprep.subr.mxu0 0.0
      %701 = vmatpush1.msra.mxu0 0.0
      %702 = vmatprep.subr.mxu0 0.0
      %703 = vmatpush1.msra.mxu0 %v674
      %704 = vmatprep.subr.mxu0 0.0
      %705 = vmatpush1.msra.mxu0 %v645
      %706 = vmatprep.subr.mxu0 0.0
      %707 = vmatpush1.msra.mxu0 %v644
      %708 = vmatprep.subr.mxu0 0.0
      %709 = vmatpush2.msra.mxu0 0.0
      %710 = vmatprep.subr.mxu0 0.0
      %711 = vmatpush2.msra.mxu0 0.0
      %712 = vmatprep.subr.mxu0 0.0
      %713 = vmatpush2.msra.mxu0 0.0
      %714 = vmatprep.subr.mxu0 0.0
      %715 = vmatpush2.msra.mxu0 0.0
      %716 = vmatprep.subr.mxu0 0.0
      %717 = vmatpush2.msra.mxu0 0.0
      %718 = vmatprep.subr.mxu0 0.0
      %719 = vmatpush2.msra.mxu0 0.0
      %720 = vmatprep.subr.mxu0 0.0
      %721 = vmatpush2.msra.mxu0 0.0
      %722 = vmatprep.subr.mxu0 0.0
      %723 = vmatpush2.msra.mxu0 0.0
      %724 = vmatprep.subr.mxu0 0.0
      %725 = vmatpush2.msra.mxu0 0.0
      %726 = vmatprep.subr.mxu0 0.0
      %727 = vmatpush2.msra.mxu0 0.0
      %728 = vmatprep.subr.mxu0 0.0
      %729 = vmatpush2.msra.mxu0 0.0
      %730 = vmatprep.subr.mxu0 0.0
      %731 = vmatpush2.msra.mxu0 0.0
      %732 = vmatprep.subr.mxu0 0.0
      %733 = vmatpush2.msra.mxu0 0.0
      %734 = vmatprep.subr.mxu0 0.0
      %735 = vmatpush2.msra.mxu0 0.0
      %736 = vmatprep.subr.mxu0 0.0
      %737 = vmatpush2.msra.mxu0 0.0
      %738 = vmatprep.subr.mxu0 0.0
      %739 = vmatpush2.msra.mxu0 0.0
      %740 = vmatprep.mubr.f32.mxu0 0.0
      %741 = vmatmul.mubr.f32.gmra.mxu0 %v649
      %v742 = vpop.f32.mrf.mxu0
      %v743 = vadd.f32 0.0, %v742
      %v744 = vpop.f32.mrf.mxu0
      %745 = vmatprep.mubr.f32.mxu0 0.0
      %746 = vmatmul.mubr.f32.gmra.mxu0 %v652
      %v747 = vpop.f32.mrf.mxu0
      %v748 = vadd.f32 0.0, %v747
      %v749 = vpop.f32.mrf.mxu0
      %750 = vmatprep.mubr.f32.mxu0 0.0
      %751 = vmatmul.mubr.f32.gmra.mxu0 %v655
      %v752 = vpop.f32.mrf.mxu0
      %v753 = vadd.f32 0.0, %v752
      %v754 = vpop.f32.mrf.mxu0
      %755 = vmatprep.mubr.f32.mxu0 0.0
      %756 = vmatmul.mubr.f32.gmra.mxu0 %v658
      %v757 = vpop.f32.mrf.mxu0
      %v758 = vadd.f32 0.0, %v757
      %v759 = vpop.f32.mrf.mxu0
      %760 = vmatprep.mubr.f32.mxu0 0.0
      %761 = vmatmul.mubr.f32.gmra.mxu0 %v661
      %v762 = vpop.f32.mrf.mxu0
      %v763 = vadd.f32 0.0, %v762
      %v764 = vpop.f32.mrf.mxu0
      %765 = vmatprep.mubr.f32.mxu0 0.0
      %766 = vmatmul.mubr.f32.gmra.mxu0 %v664
      %v767 = vpop.f32.mrf.mxu0
      %v768 = vadd.f32 0.0, %v767
      %v769 = vpop.f32.mrf.mxu0
      %770 = vmatprep.mubr.f32.mxu0 0.0
      %771 = vmatmul.mubr.f32.gmra.mxu0 %v667
      %v772 = vpop.f32.mrf.mxu0
      %v773 = vadd.f32 0.0, %v772
      %v774 = vpop.f32.mrf.mxu0
      %775 = vmatprep.mubr.f32.mxu0 0.0
      %776 = vmatmul.mubr.f32.gmra.mxu0 %v670
      %v777 = vpop.f32.mrf.mxu0
      %v778 = vadd.f32 0.0, %v777
      %v779 = vpop.f32.mrf.mxu0
      %780 = vdwg.mxu0
      %v781 = vadd.f32 %v598, %v743
      %v782 = vadd.f32 %v603, %v748
      %v783 = vadd.f32 %v608, %v753
      %v784 = vadd.f32 %v613, %v758
      %v785 = vadd.f32 %v618, %v763
      %v786 = vadd.f32 %v623, %v768
      %v787 = vadd.f32 %v628, %v773
      %v788 = vadd.f32 %v633, %v778
      %v789 = vld [vmem:[%s7] sm:$0x1]
      %v790 = vlaneseq
      %v791 = vshrl.u32 %v790, 7
      %v792 = vsub.s32 0, %v791
      %v793 = vrot.slane %v789, %v792
      %v794 = vadd.f32 %v781, %v793
      %v795 = vadd.f32 %v782, %v793
      %v796 = vadd.f32 %v783, %v793
      %v797 = vadd.f32 %v784, %v793
      %v798 = vadd.f32 %v785, %v793
      %v799 = vadd.f32 %v786, %v793
      %v800 = vadd.f32 %v787, %v793
      %v801 = vadd.f32 %v788, %v793
      %v802 = vmax.f32 %v794, 0.0
      %v803 = vmax.f32 %v795, 0.0
      %v804 = vmax.f32 %v796, 0.0
      %v805 = vmax.f32 %v797, 0.0
      %v806 = vmax.f32 %v798, 0.0
      %v807 = vmax.f32 %v799, 0.0
      %v808 = vmax.f32 %v800, 0.0
      %v809 = vmax.f32 %v801, 0.0
      %v810 = vld [vmem:[%s6] sm:$0xff]
      %v811 = vld [vmem:[%s6 + $0x8] sm:$0xff]
      %v812 = vld [vmem:[%s6 + $0x10] sm:$0xff]
      %v813 = vld [vmem:[%s6 + $0x18] sm:$0xff]
      %v814 = vld [vmem:[%s6 + $0x20] sm:$0xff]
      %v815 = vld [vmem:[%s6 + $0x28] sm:$0xff]
      %v816 = vld [vmem:[%s6 + $0x30] sm:$0xff]
      %v817 = vld [vmem:[%s6 + $0x38] sm:$0xff]
      %v818 = vld [vmem:[%s6 + $0x40] sm:$0xff]
      %v819 = vld [vmem:[%s6 + $0x48] sm:$0xff]
      %v820 = vld [vmem:[%s6 + $0x50] sm:$0xff]
      %v821 = vld [vmem:[%s6 + $0x58] sm:$0xff]
      %v822 = vld [vmem:[%s6 + $0x60] sm:$0xff]
      %v823 = vld [vmem:[%s6 + $0x68] sm:$0xff]
      %v824 = vld [vmem:[%s6 + $0x70] sm:$0xff]
      %v825 = vld [vmem:[%s6 + $0x78] sm:$0xff]
      %v826 = vld [vmem:[%s7 + $0x1] sm:$0x1]
      %v827 = vlaneseq
      %v828 = vshrl.u32 %v827, 7
      %v829 = vsub.s32 0, %v828
      %v830 = vrot.slane %v826, %v829
      %831 = vmatprep.subr.mxu0 0.0
      %832 = vmatpush1.msra.mxu0 %v825
      %833 = vmatprep.subr.mxu0 0.0
      %834 = vmatpush1.msra.mxu0 %v824
      %835 = vmatprep.subr.mxu0 0.0
      %836 = vmatpush1.msra.mxu0 %v823
      %837 = vmatprep.subr.mxu0 0.0
      %838 = vmatpush1.msra.mxu0 %v822
      %839 = vmatprep.subr.mxu0 0.0
      %840 = vmatpush1.msra.mxu0 %v821
      %841 = vmatprep.subr.mxu0 0.0
      %842 = vmatpush1.msra.mxu0 %v820
      %843 = vmatprep.subr.mxu0 0.0
      %844 = vmatpush1.msra.mxu0 %v819
      %845 = vmatprep.subr.mxu0 0.0
      %846 = vmatpush1.msra.mxu0 %v818
      %847 = vmatprep.subr.mxu0 0.0
      %848 = vmatpush1.msra.mxu0 %v817
      %849 = vmatprep.subr.mxu0 0.0
      %850 = vmatpush1.msra.mxu0 %v816
      %851 = vmatprep.subr.mxu0 0.0
      %852 = vmatpush1.msra.mxu0 %v815
      %853 = vmatprep.subr.mxu0 0.0
      %854 = vmatpush1.msra.mxu0 %v814
      %855 = vmatprep.subr.mxu0 0.0
      %856 = vmatpush1.msra.mxu0 %v813
      %857 = vmatprep.subr.mxu0 0.0
      %858 = vmatpush1.msra.mxu0 %v812
      %859 = vmatprep.subr.mxu0 0.0
      %860 = vmatpush1.msra.mxu0 %v811
      %861 = vmatprep.subr.mxu0 0.0
      %862 = vmatpush1.msra.mxu0 %v810
      %863 = vmatprep.subr.mxu0 0.0
      %864 = vmatpush2.msra.mxu0 0.0
      %865 = vmatprep.subr.mxu0 0.0
      %866 = vmatpush2.msra.mxu0 0.0
      %867 = vmatprep.subr.mxu0 0.0
      %868 = vmatpush2.msra.mxu0 0.0
      %869 = vmatprep.subr.mxu0 0.0
      %870 = vmatpush2.msra.mxu0 0.0
      %871 = vmatprep.subr.mxu0 0.0
      %872 = vmatpush2.msra.mxu0 0.0
      %873 = vmatprep.subr.mxu0 0.0
      %874 = vmatpush2.msra.mxu0 0.0
      %875 = vmatprep.subr.mxu0 0.0
      %876 = vmatpush2.msra.mxu0 0.0
      %877 = vmatprep.subr.mxu0 0.0
      %878 = vmatpush2.msra.mxu0 0.0
      %879 = vmatprep.subr.mxu0 0.0
      %880 = vmatpush2.msra.mxu0 0.0
      %881 = vmatprep.subr.mxu0 0.0
      %882 = vmatpush2.msra.mxu0 0.0
      %883 = vmatprep.subr.mxu0 0.0
      %884 = vmatpush2.msra.mxu0 0.0
      %885 = vmatprep.subr.mxu0 0.0
      %886 = vmatpush2.msra.mxu0 0.0
      %887 = vmatprep.subr.mxu0 0.0
      %888 = vmatpush2.msra.mxu0 0.0
      %889 = vmatprep.subr.mxu0 0.0
      %890 = vmatpush2.msra.mxu0 0.0
      %891 = vmatprep.subr.mxu0 0.0
      %892 = vmatpush2.msra.mxu0 0.0
      %893 = vmatprep.subr.mxu0 0.0
      %894 = vmatpush2.msra.mxu0 0.0
      %895 = vmatprep.mubr.f32.mxu0 0.0
      %896 = vmatmul.mubr.f32.gmra.mxu0 %v802
      %v897 = vpop.f32.mrf.mxu0
      %v898 = vadd.f32 %v830, %v897
      %v899 = vpop.f32.mrf.mxu0
      %900 = vmatprep.mubr.f32.mxu0 0.0
      %901 = vmatmul.mubr.f32.gmra.mxu0 %v803
      %v902 = vpop.f32.mrf.mxu0
      %v903 = vadd.f32 %v830, %v902
      %v904 = vpop.f32.mrf.mxu0
      %905 = vmatprep.mubr.f32.mxu0 0.0
      %906 = vmatmul.mubr.f32.gmra.mxu0 %v804
      %v907 = vpop.f32.mrf.mxu0
      %v908 = vadd.f32 %v830, %v907
      %v909 = vpop.f32.mrf.mxu0
      %910 = vmatprep.mubr.f32.mxu0 0.0
      %911 = vmatmul.mubr.f32.gmra.mxu0 %v805
      %v912 = vpop.f32.mrf.mxu0
      %v913 = vadd.f32 %v830, %v912
      %v914 = vpop.f32.mrf.mxu0
      %915 = vmatprep.mubr.f32.mxu0 0.0
      %916 = vmatmul.mubr.f32.gmra.mxu0 %v806
      %v917 = vpop.f32.mrf.mxu0
      %v918 = vadd.f32 %v830, %v917
      %v919 = vpop.f32.mrf.mxu0
      %920 = vmatprep.mubr.f32.mxu0 0.0
      %921 = vmatmul.mubr.f32.gmra.mxu0 %v807
      %v922 = vpop.f32.mrf.mxu0
      %v923 = vadd.f32 %v830, %v922
      %v924 = vpop.f32.mrf.mxu0
      %925 = vmatprep.mubr.f32.mxu0 0.0
      %926 = vmatmul.mubr.f32.gmra.mxu0 %v808
      %v927 = vpop.f32.mrf.mxu0
      %v928 = vadd.f32 %v830, %v927
      %v929 = vpop.f32.mrf.mxu0
      %930 = vmatprep.mubr.f32.mxu0 0.0
      %931 = vmatmul.mubr.f32.gmra.mxu0 %v809
      %v932 = vpop.f32.mrf.mxu0
      %v933 = vadd.f32 %v830, %v932
      %v934 = vpop.f32.mrf.mxu0
      %935 = vdwg.mxu0
      %936 = vadd.xlane.f32.xlu0 %v898
      %v937 = vpop.xlane.xlu0 %936
      %938 = vadd.xlane.f32.xlu0 %v903
      %v939 = vpop.xlane.xlu0 %938
      %940 = vadd.xlane.f32.xlu0 %v908
      %v941 = vpop.xlane.xlu0 %940
      %942 = vadd.xlane.f32.xlu0 %v913
      %v943 = vpop.xlane.xlu0 %942
      %944 = vadd.xlane.f32.xlu0 %v918
      %v945 = vpop.xlane.xlu0 %944
      %946 = vadd.xlane.f32.xlu0 %v923
      %v947 = vpop.xlane.xlu0 %946
      %948 = vadd.xlane.f32.xlu0 %v928
      %v949 = vpop.xlane.xlu0 %948
      %950 = vadd.xlane.f32.xlu0 %v933
      %v951 = vpop.xlane.xlu0 %950
      %v952 = vmul.f32 %v898, %v898
      %v953 = vmul.f32 %v903, %v903
      %v954 = vmul.f32 %v908, %v908
      %v955 = vmul.f32 %v913, %v913
      %v956 = vmul.f32 %v918, %v918
      %v957 = vmul.f32 %v923, %v923
      %v958 = vmul.f32 %v928, %v928
      %v959 = vmul.f32 %v933, %v933
      %960 = vadd.xlane.f32.xlu0 %v952
      %v961 = vpop.xlane.xlu0 %960
      %962 = vadd.xlane.f32.xlu0 %v953
      %v963 = vpop.xlane.xlu0 %962
      %964 = vadd.xlane.f32.xlu0 %v954
      %v965 = vpop.xlane.xlu0 %964
      %966 = vadd.xlane.f32.xlu0 %v955
      %v967 = vpop.xlane.xlu0 %966
      %968 = vadd.xlane.f32.xlu0 %v956
      %v969 = vpop.xlane.xlu0 %968
      %970 = vadd.xlane.f32.xlu0 %v957
      %v971 = vpop.xlane.xlu0 %970
      %972 = vadd.xlane.f32.xlu0 %v958
      %v973 = vpop.xlane.xlu0 %972
      %974 = vadd.xlane.f32.xlu0 %v959
      %v975 = vpop.xlane.xlu0 %974
      %v976 = vmul.f32 %v937, 0.03125
      %v977 = vmul.f32 %v939, 0.03125
      %v978 = vmul.f32 %v941, 0.03125
      %v979 = vmul.f32 %v943, 0.03125
      %v980 = vmul.f32 %v945, 0.03125
      %v981 = vmul.f32 %v947, 0.03125
      %v982 = vmul.f32 %v949, 0.03125
      %v983 = vmul.f32 %v951, 0.03125
      %v984 = vmul.f32 %v961, 0.03125
      %v985 = vmul.f32 %v963, 0.03125
      %v986 = vmul.f32 %v965, 0.03125
      %v987 = vmul.f32 %v967, 0.03125
      %v988 = vmul.f32 %v969, 0.03125
      %v989 = vmul.f32 %v971, 0.03125
      %v990 = vmul.f32 %v973, 0.03125
      %v991 = vmul.f32 %v975, 0.03125
      %v992 = vmul.f32 %v976, %v976
      %v993 = vmul.f32 %v977, %v977
      %v994 = vmul.f32 %v978, %v978
      %v995 = vmul.f32 %v979, %v979
      %v996 = vmul.f32 %v980, %v980
      %v997 = vmul.f32 %v981, %v981
      %v998 = vmul.f32 %v982, %v982
      %v999 = vmul.f32 %v983, %v983
      %v1000 = vsub.f32 %v984, %v992
      %v1001 = vsub.f32 %v985, %v993
      %v1002 = vsub.f32 %v986, %v994
      %v1003 = vsub.f32 %v987, %v995
      %v1004 = vsub.f32 %v988, %v996
      %v1005 = vsub.f32 %v989, %v997
      %v1006 = vsub.f32 %v990, %v998
      %v1007 = vsub.f32 %v991, %v999
      %v1008 = vsub.f32 %v898, %v976
      %v1009 = vsub.f32 %v903, %v977
      %v1010 = vsub.f32 %v908, %v978
      %v1011 = vsub.f32 %v913, %v979
      %v1012 = vsub.f32 %v918, %v980
      %v1013 = vsub.f32 %v923, %v981
      %v1014 = vsub.f32 %v928, %v982
      %v1015 = vsub.f32 %v933, %v983
      %v1016 = vadd.f32 %v1000, 1e-05
      %v1017 = vadd.f32 %v1001, 1e-05
      %v1018 = vadd.f32 %v1002, 1e-05
      %v1019 = vadd.f32 %v1003, 1e-05
      %v1020 = vadd.f32 %v1004, 1e-05
      %v1021 = vadd.f32 %v1005, 1e-05
      %v1022 = vadd.f32 %v1006, 1e-05
      %v1023 = vadd.f32 %v1007, 1e-05
      %v1024 = vrsqrt.pop %v1016
      %v1025 = vrsqrt.pop %v1017
      %v1026 = vrsqrt.pop %v1018
      %v1027 = vrsqrt.pop %v1019
      %v1028 = vrsqrt.pop %v1020
      %v1029 = vrsqrt.pop %v1021
      %v1030 = vrsqrt.pop %v1022
      %v1031 = vrsqrt.pop %v1023
      %v1032 = vmul.f32 %v1008, %v1024
      %v1033 = vmul.f32 %v1009, %v1025
      %v1034 = vmul.f32 %v1010, %v1026
      %v1035 = vmul.f32 %v1011, %v1027
      %v1036 = vmul.f32 %v1012, %v1028
      %v1037 = vmul.f32 %v1013, %v1029
      %v1038 = vmul.f32 %v1014, %v1030
      %v1039 = vmul.f32 %v1015, %v1031
      %v1040 = vld [vmem:[%s7 + $0x2] sm:$0x1]
      %v1041 = vlaneseq
      %v1042 = vshrl.u32 %v1041, 7
      %v1043 = vsub.s32 0, %v1042
      %v1044 = vrot.slane %v1040, %v1043
      %v1045 = vmul.f32 %v1032, %v1044
      %v1046 = vmul.f32 %v1033, %v1044
      %v1047 = vmul.f32 %v1034, %v1044
      %v1048 = vmul.f32 %v1035, %v1044
      %v1049 = vmul.f32 %v1036, %v1044
      %v1050 = vmul.f32 %v1037, %v1044
      %v1051 = vmul.f32 %v1038, %v1044
      %v1052 = vmul.f32 %v1039, %v1044
      %v1053 = vld [vmem:[%s7 + $0x3] sm:$0x1]
      %v1054 = vlaneseq
      %v1055 = vshrl.u32 %v1054, 7
      %v1056 = vsub.s32 0, %v1055
      %v1057 = vrot.slane %v1053, %v1056
      %v1058 = vadd.f32 %v1045, %v1057
      %v1059 = vadd.f32 %v1046, %v1057
      %v1060 = vadd.f32 %v1047, %v1057
      %v1061 = vadd.f32 %v1048, %v1057
      %v1062 = vadd.f32 %v1049, %v1057
      %v1063 = vadd.f32 %v1050, %v1057
      %v1064 = vadd.f32 %v1051, %v1057
      %v1065 = vadd.f32 %v1052, %v1057
      %1066 = vset.pattern.permute.xlu0 16
      %1067 = vperm.xlu0 %1066, %v636
      %v1068 = vpop.permute.xlu0 %1067
      %1070 = vset.pattern.permute.xlu0 16
      %1071 = vperm.xlu0 %1070, %v637
      %v1072 = vpop.permute.xlu0 %1071
      %1074 = vset.pattern.permute.xlu0 16
      %1075 = vperm.xlu0 %1074, %v638
      %v1076 = vpop.permute.xlu0 %1075
      %1078 = vset.pattern.permute.xlu0 16
      %1079 = vperm.xlu0 %1078, %v639
      %v1080 = vpop.permute.xlu0 %1079
      %1082 = vset.pattern.permute.xlu0 16
      %1083 = vperm.xlu0 %1082, %v640
      %v1084 = vpop.permute.xlu0 %1083
      %1086 = vset.pattern.permute.xlu0 16
      %1087 = vperm.xlu0 %1086, %v641
      %v1088 = vpop.permute.xlu0 %1087
      %1090 = vset.pattern.permute.xlu0 16
      %1091 = vperm.xlu0 %1090, %v642
      %v1092 = vpop.permute.xlu0 %1091
      %1094 = vset.pattern.permute.xlu0 16
      %1095 = vperm.xlu0 %1094, %v643
      %v1096 = vpop.permute.xlu0 %1095
      %v1098 = vmul.f32 %v1058, %v1068
      %v1099 = vmul.f32 %v1059, %v1072
      %v1100 = vmul.f32 %v1060, %v1076
      %v1101 = vmul.f32 %v1061, %v1080
      %v1102 = vmul.f32 %v1062, %v1084
      %v1103 = vmul.f32 %v1063, %v1088
      %v1104 = vmul.f32 %v1064, %v1092
      %v1105 = vmul.f32 %v1065, %v1096
      %1106 = vst.msk [vmem:[%s351] sm:$0xff] %vm377, %v1098
      %1107 = vst.msk [vmem:[%s351 + $0x8] sm:$0xff] %vm377, %v1099
      %1108 = vst.msk [vmem:[%s351 + $0x10] sm:$0xff] %vm377, %v1100
      %1109 = vst.msk [vmem:[%s351 + $0x18] sm:$0xff] %vm377, %v1101
      %1110 = vst.msk [vmem:[%s351 + $0x20] sm:$0xff] %vm377, %v1102
      %1111 = vst.msk [vmem:[%s351 + $0x28] sm:$0xff] %vm377, %v1103
      %1112 = vst.msk [vmem:[%s351 + $0x30] sm:$0xff] %vm377, %v1104
      %1113 = vst.msk [vmem:[%s351 + $0x38] sm:$0xff] %vm377, %v1105
      %s1114 = smul.u32 8, %s19
      %p1115 = scmp.lt.s32.totalorder %s1114, 15
      %s1116 = scalar_select %p1115, %s1114, 15
      %s1117 = smul.addr %s1116, 8
      %s1118 = scalar_lea.vmem %s8, %s1117
      // Predicated region
      $region53: #{tpu_custom_call.1} parent=51 // pred_check
        %p1119 = pneg %p220
      $region54: #{tpu_custom_call.1} parent=51 // pred_check_branch
        %1121 = sbr.rel (%p1119) target = $region56
      $region55: #{tpu_custom_call.1} parent=51 // pred_region
        %s1122 = smul.u32 8, %s19
      $region56: #{tpu_custom_call.1} parent=51 // pred_fallthru
        _
    $region52: #{tpu_custom_call.1} parent=5 // pred_fallthru
      _
    %p1123 = scmp.le.s32.totalorder 2, %s14
    // Predicated region
    $region57: #{tpu_custom_call.1} parent=5 // pred_check
      %p1124 = pneg %p1123
    $region58: #{tpu_custom_call.1} parent=5 // pred_check_branch
      %1126 = sbr.rel (%p1124) target = $region60
    $region59: #{tpu_custom_call.1} parent=5 // pred_region
      %s1127 = ssub.s32 %s14, 2
      // Predicated region
      $region61: #{tpu_custom_call.1} parent=59 // pred_check
        %p1128 = pneg %p226
      $region62: #{tpu_custom_call.1} parent=59 // pred_check_branch
        %1130 = sbr.rel (%p1128) target = $region64
      $region63: #{tpu_custom_call.1} parent=59 // pred_region
        %s1131 = smul.u32 8, %s20
        %p1132 = scmp.lt.s32.totalorder %s1131, 15
        %s1133 = scalar_select %p1132, %s1131, 15
        %s1134 = smul.addr %s1133, 8
        %s1135 = scalar_lea.vmem %s8, %s1134
      $region64: #{tpu_custom_call.1} parent=59 // pred_fallthru
        _
    $region60: #{tpu_custom_call.1} parent=5 // pred_fallthru
      _
  $region6: #{tpu_custom_call.1} parent=0 // loop_footer
    %s18 = sadd.s32 1, %s14
  $region7: #{tpu_custom_call.1} parent=0 // loop_footer_branch
    %13 = sbr.rel target = $region3
  $region8: #{tpu_custom_call.1} parent=0 // loop_exit
    _

</llo_original>
